<compile_context>
chip_gen: v6e
topology: v6e:2x2x1
jax: 0.10.0
libtpu: 0.0.40
codegen_flags: <defaults>
</compile_context>

<pallas_src>
import math
from functools import partial

import jax
import jax.numpy as jnp
from jax.experimental import pallas as pl
from jax.experimental.pallas import tpu as pltpu


# ----------------------------- Pallas kernel --------------------------------

def _ffn_kernel(x_ref, wgu_ref, bgu_ref, wd_ref, bd_ref, o_ref, acc_ref, *, ti):
    """One (row-tile, I-chunk) step of the fused SwiGLU FFN.

    x_ref   : (tm, C)    bf16  activation row tile (resident across i)
    wgu_ref : (C, 2*ti)  bf16  chunk-interleaved [gate | up] weight chunk
    bgu_ref : (1, 2*ti)  f32   chunk-interleaved [gate | up] bias chunk
    wd_ref  : (ti, C)    bf16  down-projection weight chunk
    bd_ref  : (1, C)     f32   down-projection bias (resident)
    o_ref   : (tm, C)    output dtype
    acc_ref : (tm, C)    f32   persistent accumulator scratch
    """
    i = pl.program_id(1)

    @pl.when(i == 0)
    def _init():
        acc_ref[...] = jnp.zeros_like(acc_ref)

    x = x_ref[...]
    # Fused gate+up projection for this I-chunk: one MXU pass, f32 accumulation.
    gu = jnp.dot(x, wgu_ref[...], preferred_element_type=jnp.float32) + bgu_ref[...]
    g = gu[:, :ti]                                      # static, lane-aligned split
    u = gu[:, ti:]
    h = jax.nn.silu(g) * u                              # f32, (tm, ti)
    # Partial down-projection, accumulate into the row-tile accumulator.
    acc_ref[...] += jnp.dot(h.astype(wd_ref.dtype), wd_ref[...],
                            preferred_element_type=jnp.float32)

    @pl.when(i == pl.num_programs(1) - 1)
    def _finalize():
        o_ref[...] = (acc_ref[...] + bd_ref[...]).astype(o_ref.dtype)


# ----------------------------- tiling helpers --------------------------------

def _round_up(x, m):
    return -(-x // m) * m


def _tpu_vmem_bytes():
    try:
        return int(pltpu.get_tpu_info().vmem_capacity_bytes)
    except Exception:
        return 128 * 1024 * 1024  # conservative default (v5e/v6e class)


def _default_tiles(vmem_cap_bytes):
    """(row_tile, inner_tile) targets per VMEM generation."""
    if vmem_cap_bytes <= (72 << 20):      # v7x-class: 64 MiB VMEM per TC
        return 512, 256
    return 1024, 512                      # v5e/v6e: 128 MiB VMEM


def _pick_inner_tile(I, target):
    """Largest MXU-friendly divisor of I that is <= target.

    Prefers 256-aligned chunks (v6e/v7x 2x256x256 MXU), then 128-aligned
    (v5e 4x128x128), then falls back to the full axis.
    """
    if I <= target:
        return I
    for step in (256, 128):
        start = (target // step) * step
        for t in range(start, step - 1, -step):
            if I % t == 0:
                return t
    return I


def _pick_row_tile(Mp, target):
    """Largest 16-aligned tile <= target, preferring exact divisors of Mp."""
    if Mp <= target:
        return Mp
    best = None
    for t in range(target, 15, -16):
        if Mp % t == 0:
            best = t
            break
    if best is not None and best * 2 >= target:
        return best                        # exact divisor -> no pad/slice copies
    return target


# ----------------------------- parameter prep --------------------------------

def prepare_ffn_params(gate_w, gate_b, up_w, up_b, down_w, down_b,
                       *, inner_tile=None, compute_dtype=jnp.bfloat16):
    """One-time prep: bf16 cast + chunk-interleaved gate/up fusion.

    Weight convention here is (in, out) — i.e. the transpose of torch
    nn.Linear.weight.  Done once at init so the hot path never re-casts or
    re-packs weights (no per-call f32->bf16 HBM traffic).
    """
    C, I = gate_w.shape
    assert up_w.shape == (C, I) and down_w.shape == (I, C)
    if inner_tile is None:
        _, inner_tile = _default_tiles(_tpu_vmem_bytes())
    ti = _pick_inner_tile(I, inner_tile)
    gi = I // ti

    wg = gate_w.astype(compute_dtype).reshape(C, gi, ti)
    wu = up_w.astype(compute_dtype).reshape(C, gi, ti)
    wgu = jnp.concatenate([wg, wu], axis=2).reshape(C, 2 * I)      # (C, 2*I)

    bg = gate_b.astype(jnp.float32).reshape(gi, ti)
    bu = up_b.astype(jnp.float32).reshape(gi, ti)
    bgu = jnp.concatenate([bg, bu], axis=1).reshape(1, 2 * I)      # (1, 2*I)

    return dict(
        wgu=wgu, bgu=bgu,
        wd=down_w.astype(compute_dtype),                           # (I, C)
        bd=down_b.astype(jnp.float32).reshape(1, C),               # (1, C)
        C=C, I=I, ti=ti,
    )


# ----------------------------- wrapper ---------------------------------------

def feed_forward(x, params, *, row_tile=None, out_dtype=None):
    """down_proj(SiLU(gate_proj(x)) * up_proj(x)) with a fused Pallas kernel."""
    orig_shape = x.shape
    out_dtype = x.dtype if out_dtype is None else out_dtype
    C, I, ti = params["C"], params["I"], params["ti"]
    assert x.shape[-1] == C
    gi = I // ti

    vmem_cap = _tpu_vmem_bytes()
    is_small_vmem = vmem_cap <= (72 << 20)          # v7x-class (2 TCs, 64 MiB/TC)
    if row_tile is None:
        row_tile, _ = _default_tiles(vmem_cap)

    x2d = x.reshape(-1, C)
    M = x2d.shape[0]

    # --- row tiling: 16-aligned (bf16 sublane packing), divisor-preferring ----
    Mp = _round_up(M, 16)
    tm = _pick_row_tile(Mp, row_tile)
    gm = -(-Mp // tm)
    if is_small_vmem and gm == 1 and Mp >= 32:
        # v7x megacore: make sure both TensorCores get a row tile.
        tm = _round_up(-(-Mp // 2), 16)
        gm = -(-Mp // tm)
    Mp = gm * tm

    # --- activation: cast to bf16, pad only if needed -------------------------
    x2d = x2d.astype(jnp.bfloat16)
    if Mp != M:
        x2d = jnp.pad(x2d, ((0, Mp - M), (0, 0)))

    # --- explicit, generation-aware VMEM budget -------------------------------
    out_bytes = jnp.dtype(out_dtype).itemsize
    est = (2 * (tm * C * 2                     # x tile (bf16), double-buffered
                + C * (2 * ti) * 2             # fused gate/up weight tile (bf16)
                + (2 * ti) * 4                 # fused bias tile (f32)
                + ti * C * 2                   # down weight tile (bf16)
                + C * 4                        # down bias (f32)
                + tm * C * out_bytes)          # output tile
           + tm * C * 4)                       # f32 accumulator scratch
    vmem_limit = int(min(max(est * 3 // 2, 16 << 20), int(vmem_cap * 0.85)))

    out2d = pl.pallas_call(
        partial(_ffn_kernel, ti=ti),
        out_shape=jax.ShapeDtypeStruct((Mp, C), out_dtype),
        grid=(gm, gi),                                       # reduction axis last
        in_specs=[
            pl.BlockSpec((tm, C), lambda m, i: (m, 0)),      # x row tile
            pl.BlockSpec((C, 2 * ti), lambda m, i: (0, i)),  # fused gate/up weights
            pl.BlockSpec((1, 2 * ti), lambda m, i: (0, i)),  # fused gate/up bias
            pl.BlockSpec((ti, C), lambda m, i: (i, 0)),      # down weight chunk
            pl.BlockSpec((1, C), lambda m, i: (0, 0)),       # down bias (resident)
        ],
        out_specs=pl.BlockSpec((tm, C), lambda m, i: (m, 0)),
        scratch_shapes=[pltpu.VMEM((tm, C), jnp.float32)],
        compiler_params=pltpu.CompilerParams(
            dimension_semantics=("parallel", "arbitrary"),
            vmem_limit_bytes=vmem_limit,
        ),
    )(x2d, params["wgu"], params["bgu"], params["wd"], params["bd"])

    if Mp != M:
        out2d = out2d[:M]
    return out2d.reshape(orig_shape).astype(out_dtype)


# ----------------------------- reference & init ------------------------------

def ffn_reference(x, wg, bg, wu, bu, wd, bd):
    g = x @ wg + bg
    u = x @ wu + bu
    return (jax.nn.silu(g) * u) @ wd + bd


def init_ffn_params(key, n_embd, intermediate_size):
    ks = jax.random.split(key, 6)
    s = 0.02
    return dict(
        gate_w=jax.random.normal(ks[0], (n_embd, intermediate_size), jnp.float32) * s,
        gate_b=jax.random.normal(ks[1], (intermediate_size,), jnp.float32) * s,
        up_w=jax.random.normal(ks[2], (n_embd, intermediate_size), jnp.float32) * s,
        up_b=jax.random.normal(ks[3], (intermediate_size,), jnp.float32) * s,
        down_w=jax.random.normal(ks[4], (intermediate_size, n_embd), jnp.float32) * s,
        down_b=jax.random.normal(ks[5], (n_embd,), jnp.float32) * s,
    )


# ----------------------------- main ------------------------------------------

if __name__ == "__main__":
    # Small AllamoTransformerConfig-consistent shapes.
    n_embd = 256
    multiple_of = 256
    intermediate_size = int(2 * (4 * n_embd) / 3)
    intermediate_size = multiple_of * ((intermediate_size + multiple_of - 1) // multiple_of)
    # -> 768 (multiple of 256, lane-aligned)

    B, T = 2, 8

    key = jax.random.PRNGKey(0)
    k_x, k_p = jax.random.split(key)
    x = jax.random.normal(k_x, (B, T, n_embd), jnp.float32)
    p = init_ffn_params(k_p, n_embd, intermediate_size)

    # One-time prep: bf16 cast + gate/up fusion (not in the per-call hot path).
    pp = prepare_ffn_params(p["gate_w"], p["gate_b"], p["up_w"], p["up_b"],
                            p["down_w"], p["down_b"])

    out = feed_forward(x, pp)
    out = jax.block_until_ready(out)

    assert out.shape == x.shape and out.dtype == x.dtype

    # Numerical check vs. pure-JAX f32 reference (loose tol: bf16 matmul operands).
    ref = ffn_reference(x, p["gate_w"], p["gate_b"], p["up_w"], p["up_b"],
                        p["down_w"], p["down_b"])
    max_err = float(jnp.max(jnp.abs(out - ref)))
    tol = 5e-3 + 5e-2 * float(jnp.max(jnp.abs(ref)))
    assert max_err < tol, f"max_err={max_err} tol={tol}"

    print("KERNEL_OK")
</pallas_src>

<mosaic_0001>
module attributes {stable_mosaic.version = 11 : i64} {
  func.func @_ffn_kernel(%arg0: i32, %arg1: i32, %arg2: memref<16x256xbf16, #tpu.memory_space<vmem>>, %arg3: memref<256x512xbf16, #tpu.memory_space<vmem>>, %arg4: memref<1x512xf32, #tpu.memory_space<vmem>>, %arg5: memref<256x256xbf16, #tpu.memory_space<vmem>>, %arg6: memref<1x256xf32, #tpu.memory_space<vmem>>, %arg7: memref<16x256xf32, #tpu.memory_space<vmem>>, %arg8: memref<16x256xf32, #tpu.memory_space<vmem>>) attributes {dimension_semantics = [#tpu.dimension_semantics<parallel>, #tpu.dimension_semantics<arbitrary>], iteration_bounds = array<i64: 1, 3>, scalar_prefetch = 0 : i64, scratch_operands = 1 : i64, tpu.core_type = #tpu.core_type<tc>, window_params = [{transform_indices = @transform_0, window_bounds = array<i64: 16, 256>}, {transform_indices = @transform_1, window_bounds = array<i64: 256, 512>}, {transform_indices = @transform_2, window_bounds = array<i64: 1, 512>}, {transform_indices = @transform_3, window_bounds = array<i64: 256, 256>}, {pipeline_mode = #tpu.pipeline_mode<synchronous>, transform_indices = @transform_4, window_bounds = array<i64: 1, 256>}, {transform_indices = @transform_5, window_bounds = array<i64: 16, 256>}]} {
    %c0_i32 = arith.constant 0 : i32
    %0 = arith.cmpi eq, %arg1, %c0_i32 : i32
    %1 = arith.extui %0 : i1 to i32
    %c0_i32_0 = arith.constant 0 : i32
    %2 = arith.cmpi ne, %1, %c0_i32_0 : i32
    scf.if %2 {
      %cst_15 = arith.constant 0.000000e+00 : f32
      %27 = vector.broadcast %cst_15 : f32 to vector<16x256xf32>
      %c0_16 = arith.constant 0 : index
      %c0_17 = arith.constant 0 : index
      %28 = vector.load %arg8[%c0_16, %c0_17] : memref<16x256xf32, #tpu.memory_space<vmem>>, vector<16x256xf32>
      tpu.vector_store %arg8[%c0_16, %c0_17], %27 {strides = array<i32>} : memref<16x256xf32, #tpu.memory_space<vmem>>, vector<16x256xf32>,
    } else {
    }
    %c0 = arith.constant 0 : index
    %c0_1 = arith.constant 0 : index
    %3 = vector.load %arg2[%c0, %c0_1] : memref<16x256xbf16, #tpu.memory_space<vmem>>, vector<16x256xbf16>
    %c0_2 = arith.constant 0 : index
    %c0_3 = arith.constant 0 : index
    %4 = vector.load %arg3[%c0_2, %c0_3] : memref<256x512xbf16, #tpu.memory_space<vmem>>, vector<256x512xbf16>
    %cst = arith.constant dense<0.000000e+00> : vector<16x512xf32>
    %5 = tpu.matmul %3, %4, %cst {dimension_numbers = #tpu.dot_dimension_numbers<[1], [0], [0], [1], [0, 0, 1, 1], [], []>} : vector<16x256xbf16>, vector<256x512xbf16>, vector<16x512xf32> -> vector<16x512xf32>
    %c0_4 = arith.constant 0 : index
    %c0_5 = arith.constant 0 : index
    %6 = vector.load %arg4[%c0_4, %c0_5] : memref<1x512xf32, #tpu.memory_space<vmem>>, vector<1x512xf32>
    %7 = vector.broadcast %6 : vector<1x512xf32> to vector<16x512xf32>
    %8 = arith.addf %5, %7 : vector<16x512xf32>
    %9 = vector.extract_strided_slice %8 {offsets = [0, 0], sizes = [16, 256], strides = [1, 1]} : vector<16x512xf32> to vector<16x256xf32>
    %10 = vector.extract_strided_slice %8 {offsets = [0, 256], sizes = [16, 256], strides = [1, 1]} : vector<16x512xf32> to vector<16x256xf32>
    %11 = arith.negf %9 : vector<16x256xf32>
    %12 = math.exp %11 : vector<16x256xf32>
    %cst_6 = arith.constant 1.000000e+00 : f32
    %13 = vector.broadcast %cst_6 : f32 to vector<16x256xf32>
    %14 = arith.addf %13, %12 : vector<16x256xf32>
    %15 = arith.divf %13, %14 : vector<16x256xf32>
    %16 = arith.mulf %9, %15 : vector<16x256xf32>
    %17 = arith.mulf %16, %10 : vector<16x256xf32>
    %c0_7 = arith.constant 0 : index
    %c0_8 = arith.constant 0 : index
    %18 = vector.load %arg8[%c0_7, %c0_8] : memref<16x256xf32, #tpu.memory_space<vmem>>, vector<16x256xf32>
    %19 = arith.truncf %17 : vector<16x256xf32> to vector<16x256xbf16>
    %c0_9 = arith.constant 0 : index
    %c0_10 = arith.constant 0 : index
    %20 = vector.load %arg5[%c0_9, %c0_10] : memref<256x256xbf16, #tpu.memory_space<vmem>>, vector<256x256xbf16>
    %cst_11 = arith.constant dense<0.000000e+00> : vector<16x256xf32>
    %21 = tpu.matmul %19, %20, %cst_11 {dimension_numbers = #tpu.dot_dimension_numbers<[1], [0], [0], [1], [0, 0, 1, 1], [], []>} : vector<16x256xbf16>, vector<256x256xbf16>, vector<16x256xf32> -> vector<16x256xf32>
    %22 = arith.addf %18, %21 : vector<16x256xf32>
    %c0_12 = arith.constant 0 : index
    %c0_13 = arith.constant 0 : index
    %23 = vector.load %arg8[%c0_12, %c0_13] : memref<16x256xf32, #tpu.memory_space<vmem>>, vector<16x256xf32>
    tpu.vector_store %arg8[%c0_12, %c0_13], %22 {strides = array<i32>} : memref<16x256xf32, #tpu.memory_space<vmem>>, vector<16x256xf32>,
    %c2_i32 = arith.constant 2 : i32
    %24 = arith.cmpi eq, %arg1, %c2_i32 : i32
    %25 = arith.extui %24 : i1 to i32
    %c0_i32_14 = arith.constant 0 : i32
    %26 = arith.cmpi ne, %25, %c0_i32_14 : i32
    scf.if %26 {
      %c0_15 = arith.constant 0 : index
      %c0_16 = arith.constant 0 : index
      %27 = vector.load %arg8[%c0_15, %c0_16] : memref<16x256xf32, #tpu.memory_space<vmem>>, vector<16x256xf32>
      %c0_17 = arith.constant 0 : index
      %c0_18 = arith.constant 0 : index
      %28 = vector.load %arg6[%c0_17, %c0_18] : memref<1x256xf32, #tpu.memory_space<vmem>>, vector<1x256xf32>
      %29 = vector.broadcast %28 : vector<1x256xf32> to vector<16x256xf32>
      %30 = arith.addf %27, %29 : vector<16x256xf32>
      %c0_19 = arith.constant 0 : index
      %c0_20 = arith.constant 0 : index
      %31 = vector.load %arg7[%c0_19, %c0_20] : memref<16x256xf32, #tpu.memory_space<vmem>>, vector<16x256xf32>
      tpu.vector_store %arg7[%c0_19, %c0_20], %30 {strides = array<i32>} : memref<16x256xf32, #tpu.memory_space<vmem>>, vector<16x256xf32>,
    } else {
    }
    return
  }
  func.func @transform_0(%arg0: i32, %arg1: i32) -> (i32, i32) {
    %c0_i32 = arith.constant 0 : i32
    %c0_i32_0 = arith.constant 0 : i32
    return %arg0, %c0_i32 : i32, i32
  }
  func.func @transform_1(%arg0: i32, %arg1: i32) -> (i32, i32) {
    %c0_i32 = arith.constant 0 : i32
    %c0_i32_0 = arith.constant 0 : i32
    return %c0_i32, %arg1 : i32, i32
  }
  func.func @transform_2(%arg0: i32, %arg1: i32) -> (i32, i32) {
    %c0_i32 = arith.constant 0 : i32
    %c0_i32_0 = arith.constant 0 : i32
    return %c0_i32, %arg1 : i32, i32
  }
  func.func @transform_3(%arg0: i32, %arg1: i32) -> (i32, i32) {
    %c0_i32 = arith.constant 0 : i32
    %c0_i32_0 = arith.constant 0 : i32
    return %arg1, %c0_i32 : i32, i32
  }
  func.func @transform_4(%arg0: i32, %arg1: i32) -> (i32, i32) {
    %c0_i32 = arith.constant 0 : i32
    %c0_i32_0 = arith.constant 0 : i32
    %c0_i32_1 = arith.constant 0 : i32
    return %c0_i32, %c0_i32_0 : i32, i32
  }
  func.func @transform_5(%arg0: i32, %arg1: i32) -> (i32, i32) {
    %c0_i32 = arith.constant 0 : i32
    %c0_i32_0 = arith.constant 0 : i32
    return %arg0, %c0_i32 : i32, i32
  }
}

</mosaic_0001>

<llo_original>
// kernel: tpu_custom_call.1
$region0: #{tpu_custom_call.1}
  #allocation0 [shape = 'u32[]', space=smem, size = 0x4, offset = 0x4, fixed_abs, tag = 'smem constant byte address 0x4 - core index']
  #allocation1 [shape = 'u32[144,128]{1,0:T(1,128)}', space=vmem, size = 0x12000, scoped, tag = 'internal scratch']
  #allocation2 [shape = 'f32[16,256]{1,0:T(8,128)}', space=vmem, size = 0x4000, scoped, tag = 'scratch operand']
  %s0 = inlined_call_operand.hbm [shape: bf16[16,256], index: 0, kind: input, shape index: {}]
  %s1 = inlined_call_operand.hbm [shape: bf16[256,1536], index: 1, kind: input, shape index: {}]
  %s2 = inlined_call_operand.hbm [shape: f32[1,1536], index: 2, kind: input, shape index: {}]
  %s3 = inlined_call_operand.hbm [shape: bf16[768,256], index: 3, kind: input, shape index: {}]
  %s4 = inlined_call_operand.vmem [shape: f32[1,256], index: 4, kind: input, shape index: {}]
  %s5 = inlined_call_operand.hbm [shape: f32[16,256], index: 5, kind: output, shape index: {}]
  %s6 = sld [smem:[#allocation0]]
  $region77: #{tpu_custom_call.1} parent=0
    _
  %s8 = ssub.s32 1, %s6
  %s9 = scalar_select 0, %s8, %s6
  $region1: #{tpu_custom_call.1} parent=0
    #allocation3 [shape = 'u8[8192]{0}', space=vmem, size = 0x2000, scoped, tag = 'input window, operand 0, single buffered']
    #allocation4 [shape = 's32[2]{0}', space=sflag, size = 0x8, scoped, tag = 'scoped memory for tpu_custom_call.1']
    #allocation5 [shape = 's32[2]{0}', space=sflag, size = 0x8, scoped, tag = 'scoped memory for tpu_custom_call.1']
    #allocation6 [shape = 'u8[524288]{0}', space=vmem, size = 0x80000, scoped, tag = 'input window, operand 1']
    #allocation7 [shape = 's32[2]{0}', space=sflag, size = 0x8, scoped, tag = 'scoped memory for tpu_custom_call.1']
    #allocation8 [shape = 'u8[4096]{0}', space=vmem, size = 0x1000, scoped, tag = 'input window, operand 2']
    #allocation9 [shape = 'u8[262144]{0}', space=vmem, size = 0x40000, scoped, tag = 'input window, operand 3']
    #allocation10 [shape = 's32[2]{0}', space=sflag, size = 0x8, scoped, tag = 'scoped memory for tpu_custom_call.1']
    #allocation11 [shape = 'u8[16384]{0}', space=vmem, size = 0x4000, scoped, tag = 'output window, operand 0, single buffered']
    %10 = vsyncpa [#allocation4], 0
    %11 = vsyncpa [#allocation7], 0
    %s12 = scalar_lea.sflag [#allocation7], 1
    %13 = vsyncpa %s12, 0
    %14 = vsyncpa [#allocation10], 0
    %s15 = scalar_lea.sflag [#allocation10], 1
    %16 = vsyncpa %s15, 0
    %17 = vsyncpa [#allocation5], 0
    loop: start=0, step=1, limit=5
    $region2: #{tpu_custom_call.1} parent=1 // loop_pre_header
      _
    $region3: #{tpu_custom_call.1} parent=1 // loop_header
      %s19 = sphi 0, %s23
      %p20 = scmp.ge.s32.totalorder %s19, 5
      %s26 = sphi 0, %s38
      %s27 = sphi 0, %s34
      %s28 = sphi 0, %s26
      %s29 = sphi 0, %s27
      %s30 = sphi 0, %s28
      %s31 = sphi 0, %s29
      %s41 = sphi 0, %s43
      %s44 = sphi 0, %s41
      %s45 = sphi 0, %s44
      %s61 = sphi 0, %s45
      %s67 = sphi 0, %s69
      %s70 = sphi 0, %s67
      %s71 = sphi 0, %s70
      %s87 = sphi 0, %s71
      %s93 = sphi 0, %s95
      %s96 = sphi 0, %s93
      %s97 = sphi 0, %s96
      %s113 = sphi 0, %s97
      %s119 = sphi 0, %s121
      %s122 = sphi 0, %s119
      %s123 = sphi 0, %s122
      %s139 = sphi 0, %s123
      %s143 = sphi 0, %s143
      %s145 = sphi 0, %s143
      %s146 = sphi 0, %s145
      %s160 = sphi 0, %s146
      %s166 = sphi 0, %s168
      %s169 = sphi 0, %s166
      %s170 = sphi 0, %s169
      %s186 = sphi 0, %s170
    $region4: #{tpu_custom_call.1} parent=1 // loop_header_branch
      %22 = sbr.rel (%p20) target = $region8
    $region5: #{tpu_custom_call.1} parent=1 // loop_body
      %s24 = ssub.s32 %s19, 1
      %s25 = ssub.s32 %s19, 2
      %s32 = sadd.s32 1, %s27
      %p33 = scmp.ge.s32.totalorder %s32, 3
      %s34 = scalar_select %p33, 0, %s32
      %s35 = sadd.s32 1, %s26
      %s36 = scalar_select %p33, %s35, %s26
      %p37 = scmp.ge.s32.totalorder %s36, 1
      %s38 = scalar_select %p37, 0, %s36
      %s39 = ssub.s32 %s26, %s38
      %p40 = scmp.eq.s32.totalorder %s39, 0
      %s42 = sadd.s32 %s41, 1
      %s43 = scalar_select %p40, %s41, %s42
      %p46 = pneg %p40
      %p47 = scmp.eq.s32.totalorder %s19, 2
      %p48 = por %p46, %p47
      %p49 = scmp.ne.s32.totalorder %s41, %s44
      %p50 = scmp.eq.s32.totalorder %s19, 0
      %p51 = por %p49, %p50
      %p52 = scmp.ne.s32.totalorder %s41, %s44
      %p53 = scmp.eq.s32.totalorder %s24, 2
      %p54 = por %p52, %p53
      %p55 = scmp.ne.s32.totalorder %s44, %s45
      %p56 = scmp.eq.s32.totalorder %s24, 0
      %p57 = por %p55, %p56
      %p58 = scmp.ne.s32.totalorder %s44, %s45
      %p59 = scmp.eq.s32.totalorder %s25, 2
      %p60 = por %p58, %p59
      %p62 = scmp.ne.s32.totalorder %s45, %s61
      %p63 = scmp.eq.s32.totalorder %s25, 0
      %p64 = por %p62, %p63
      %s65 = ssub.s32 %s27, %s34
      %p66 = scmp.eq.s32.totalorder %s65, 0
      %s68 = sadd.s32 %s67, 1
      %s69 = scalar_select %p66, %s67, %s68
      %p72 = pneg %p66
      %p73 = scmp.eq.s32.totalorder %s19, 2
      %p74 = por %p72, %p73
      %p75 = scmp.ne.s32.totalorder %s67, %s70
      %p76 = scmp.eq.s32.totalorder %s19, 0
      %p77 = por %p75, %p76
      %p78 = scmp.ne.s32.totalorder %s67, %s70
      %p79 = scmp.eq.s32.totalorder %s24, 2
      %p80 = por %p78, %p79
      %p81 = scmp.ne.s32.totalorder %s70, %s71
      %p82 = scmp.eq.s32.totalorder %s24, 0
      %p83 = por %p81, %p82
      %p84 = scmp.ne.s32.totalorder %s70, %s71
      %p85 = scmp.eq.s32.totalorder %s25, 2
      %p86 = por %p84, %p85
      %p88 = scmp.ne.s32.totalorder %s71, %s87
      %p89 = scmp.eq.s32.totalorder %s25, 0
      %p90 = por %p88, %p89
      %s91 = ssub.s32 %s27, %s34
      %p92 = scmp.eq.s32.totalorder %s91, 0
      %s94 = sadd.s32 %s93, 1
      %s95 = scalar_select %p92, %s93, %s94
      %p98 = pneg %p92
      %p99 = scmp.eq.s32.totalorder %s19, 2
      %p100 = por %p98, %p99
      %p101 = scmp.ne.s32.totalorder %s93, %s96
      %p102 = scmp.eq.s32.totalorder %s19, 0
      %p103 = por %p101, %p102
      %p104 = scmp.ne.s32.totalorder %s93, %s96
      %p105 = scmp.eq.s32.totalorder %s24, 2
      %p106 = por %p104, %p105
      %p107 = scmp.ne.s32.totalorder %s96, %s97
      %p108 = scmp.eq.s32.totalorder %s24, 0
      %p109 = por %p107, %p108
      %p110 = scmp.ne.s32.totalorder %s96, %s97
      %p111 = scmp.eq.s32.totalorder %s25, 2
      %p112 = por %p110, %p111
      %p114 = scmp.ne.s32.totalorder %s97, %s113
      %p115 = scmp.eq.s32.totalorder %s25, 0
      %p116 = por %p114, %p115
      %s117 = ssub.s32 %s27, %s34
      %p118 = scmp.eq.s32.totalorder %s117, 0
      %s120 = sadd.s32 %s119, 1
      %s121 = scalar_select %p118, %s119, %s120
      %p124 = pneg %p118
      %p125 = scmp.eq.s32.totalorder %s19, 2
      %p126 = por %p124, %p125
      %p127 = scmp.ne.s32.totalorder %s119, %s122
      %p128 = scmp.eq.s32.totalorder %s19, 0
      %p129 = por %p127, %p128
      %p130 = scmp.ne.s32.totalorder %s119, %s122
      %p131 = scmp.eq.s32.totalorder %s24, 2
      %p132 = por %p130, %p131
      %p133 = scmp.ne.s32.totalorder %s122, %s123
      %p134 = scmp.eq.s32.totalorder %s24, 0
      %p135 = por %p133, %p134
      %p136 = scmp.ne.s32.totalorder %s122, %s123
      %p137 = scmp.eq.s32.totalorder %s25, 2
      %p138 = por %p136, %p137
      %p140 = scmp.ne.s32.totalorder %s123, %s139
      %p141 = scmp.eq.s32.totalorder %s25, 0
      %p142 = por %p140, %p141
      %s144 = sadd.s32 %s143, 1
      %p147 = scmp.eq.s32.totalorder %s19, 2
      %p148 = scmp.ne.s32.totalorder %s143, %s145
      %p149 = scmp.eq.s32.totalorder %s19, 0
      %p150 = por %p148, %p149
      %p151 = scmp.ne.s32.totalorder %s143, %s145
      %p152 = scmp.eq.s32.totalorder %s24, 2
      %p153 = por %p151, %p152
      %p154 = scmp.ne.s32.totalorder %s145, %s146
      %p155 = scmp.eq.s32.totalorder %s24, 0
      %p156 = por %p154, %p155
      %p157 = scmp.ne.s32.totalorder %s145, %s146
      %p158 = scmp.eq.s32.totalorder %s25, 2
      %p159 = por %p157, %p158
      %p161 = scmp.ne.s32.totalorder %s146, %s160
      %p162 = scmp.eq.s32.totalorder %s25, 0
      %p163 = por %p161, %p162
      %s164 = ssub.s32 %s26, %s38
      %p165 = scmp.eq.s32.totalorder %s164, 0
      %s167 = sadd.s32 %s166, 1
      %s168 = scalar_select %p165, %s166, %s167
      %p171 = pneg %p165
      %p172 = scmp.eq.s32.totalorder %s19, 2
      %p173 = por %p171, %p172
      %p174 = scmp.ne.s32.totalorder %s166, %s169
      %p175 = scmp.eq.s32.totalorder %s19, 0
      %p176 = por %p174, %p175
      %p177 = scmp.ne.s32.totalorder %s166, %s169
      %p178 = scmp.eq.s32.totalorder %s24, 2
      %p179 = por %p177, %p178
      %p180 = scmp.ne.s32.totalorder %s169, %s170
      %p181 = scmp.eq.s32.totalorder %s24, 0
      %p182 = por %p180, %p181
      %p183 = scmp.ne.s32.totalorder %s169, %s170
      %p184 = scmp.eq.s32.totalorder %s25, 2
      %p185 = por %p183, %p184
      %p187 = scmp.ne.s32.totalorder %s170, %s186
      %p188 = scmp.eq.s32.totalorder %s25, 0
      %p189 = por %p187, %p188
      %p190 = scmp.le.s32.totalorder 1, %s19
      %p191 = scmp.lt.s32.totalorder %s19, 4
      %p192 = pnand %p190, %p191
      %p193 = pneg %p192
      // Predicated region
      $region9: #{tpu_custom_call.1} parent=5 // pred_check
        _
      $region10: #{tpu_custom_call.1} parent=5 // pred_check_branch
        %195 = sbr.rel (%p192) target = $region12
      $region11: #{tpu_custom_call.1} parent=5 // pred_region
        %s196 = ssub.s32 %s19, 1
        // Predicated region
        $region13: #{tpu_custom_call.1} parent=11 // pred_check
          %p197 = pneg %p57
        $region14: #{tpu_custom_call.1} parent=11 // pred_check_branch
          %199 = sbr.rel (%p197) target = $region16
        $region15: #{tpu_custom_call.1} parent=11 // pred_region
          %s200 = smul.u32 2, %s28
          %s202 = ssub.s32 256, 256
          %203 = vsyncadd [#allocation4], %s202
          %s204 = smul.addr %s200, 2
          %s205 = smul.addr %s204, 64
          %s206 = scalar_lea.hbm %s0, %s205
          %s207 = sshll.u32 [#allocation3], 4
          %s208 = int_to_ptr.vmem [resolvable:$true] %s207
          %213 = dma.hbm_to_vmem [thread:$0]  %s206, 256, %s208, [#allocation4], 128, 128, 8
        $region16: #{tpu_custom_call.1} parent=11 // pred_fallthru
          _
        // Predicated region
        $region17: #{tpu_custom_call.1} parent=11 // pred_check
          %p214 = pneg %p156
        $region18: #{tpu_custom_call.1} parent=11 // pred_check_branch
          %216 = sbr.rel (%p214) target = $region20
        $region19: #{tpu_custom_call.1} parent=11 // pred_region
          _
        $region20: #{tpu_custom_call.1} parent=11 // pred_fallthru
          _
      $region12: #{tpu_custom_call.1} parent=5 // pred_fallthru
        _
      %p217 = scmp.lt.s32.totalorder %s19, 3
      // Predicated region
      $region21: #{tpu_custom_call.1} parent=5 // pred_check
        %p218 = pneg %p217
      $region22: #{tpu_custom_call.1} parent=5 // pred_check_branch
        %220 = sbr.rel (%p218) target = $region24
      $region23: #{tpu_custom_call.1} parent=5 // pred_region
        // Predicated region
        $region25: #{tpu_custom_call.1} parent=23 // pred_check
          %p221 = pneg %p77
        $region26: #{tpu_custom_call.1} parent=23 // pred_check_branch
          %223 = sbr.rel (%p221) target = $region28
        $region27: #{tpu_custom_call.1} parent=23 // pred_region
          %s224 = sand.u32 %s19, 1
          %s225 = scalar_lea.sflag [#allocation7], %s224
          %s226 = sand.u32 %s67, 1
          %s227 = smul.addr %s226, 512
          %s228 = scalar_lea.vmem [#allocation6], %s227
          %s229 = smul.u32 4, %s27
          %s231 = ssub.s32 8192, 8192
          %232 = vsyncadd %s225, %s231
          %s233 = smul.addr %s229, 64
          %s234 = scalar_lea.hbm %s1, %s233
          %s235 = sshll.u32 %s228, 4
          %s236 = int_to_ptr.vmem [resolvable:$true] %s235
          %241 = dma.hbm_to_vmem [thread:$0]  %s234, 8192, %s236, %s225, 768, 256, 16
        $region28: #{tpu_custom_call.1} parent=23 // pred_fallthru
          _
        // Predicated region
        $region29: #{tpu_custom_call.1} parent=23 // pred_check
          %p242 = pneg %p103
        $region30: #{tpu_custom_call.1} parent=23 // pred_check_branch
          %244 = sbr.rel (%p242) target = $region32
        $region31: #{tpu_custom_call.1} parent=23 // pred_region
          %s245 = sand.u32 %s19, 1
          %s246 = scalar_lea.sflag [#allocation7], %s245
          %s247 = sand.u32 %s93, 1
          %s248 = smul.addr %s247, 4
          %s249 = scalar_lea.vmem [#allocation8], %s248
          %s250 = smul.u32 4, %s27
          %s252 = ssub.s32 64, 64
          %253 = vsyncadd %s246, %s252
          %s254 = smul.addr %s250, 16
          %s255 = scalar_lea.hbm %s2, %s254
          %s257 = sshll.u32 %s249, 4
          %s258 = int_to_ptr.vmem [resolvable:$true] %s257
          %260 = dma.hbm_to_vmem [thread:$0]  %s255, 64, %s258, %s246
        $region32: #{tpu_custom_call.1} parent=23 // pred_fallthru
          _
        // Predicated region
        $region33: #{tpu_custom_call.1} parent=23 // pred_check
          %p261 = pneg %p129
        $region34: #{tpu_custom_call.1} parent=23 // pred_check_branch
          %263 = sbr.rel (%p261) target = $region36
        $region35: #{tpu_custom_call.1} parent=23 // pred_region
          %s264 = sand.u32 %s119, 1
          %s265 = scalar_lea.sflag [#allocation10], %s264
          %s266 = sand.u32 %s119, 1
          %s267 = smul.addr %s266, 256
          %s268 = scalar_lea.vmem [#allocation9], %s267
          %s269 = smul.u32 32, %s27
          %s271 = ssub.s32 4096, 4096
          %272 = vsyncadd %s265, %s271
          %s273 = smul.addr %s269, 2
          %s274 = smul.addr %s273, 64
          %s275 = scalar_lea.hbm %s3, %s274
          %s276 = sshll.u32 %s268, 4
          %s277 = int_to_ptr.vmem [resolvable:$true] %s276
          %282 = dma.hbm_to_vmem [thread:$0]  %s275, 4096, %s277, %s265, 128, 128, 8
        $region36: #{tpu_custom_call.1} parent=23 // pred_fallthru
          _
      $region24: #{tpu_custom_call.1} parent=5 // pred_fallthru
        _
      %p283 = scmp.le.s32.totalorder 1, %s19
      %p284 = scmp.lt.s32.totalorder %s19, 4
      %p285 = pnand %p283, %p284
      %p286 = pneg %p285
      // Predicated region
      $region37: #{tpu_custom_call.1} parent=5 // pred_check
        _
      $region38: #{tpu_custom_call.1} parent=5 // pred_check_branch
        %288 = sbr.rel (%p285) target = $region40
      $region39: #{tpu_custom_call.1} parent=5 // pred_region
        %s289 = ssub.s32 %s19, 1
        // Predicated region
        $region41: #{tpu_custom_call.1} parent=39 // pred_check
          %p290 = pneg %p57
        $region42: #{tpu_custom_call.1} parent=39 // pred_check_branch
          %292 = sbr.rel (%p290) target = $region44
        $region43: #{tpu_custom_call.1} parent=39 // pred_region
          %293 = dma.done [#allocation4], 256
        $region44: #{tpu_custom_call.1} parent=39 // pred_fallthru
          _
        %s294 = sand.u32 %s24, 1
        %s295 = scalar_lea.sflag [#allocation7], %s294
        %s296 = sand.u32 %s70, 1
        %s297 = smul.addr %s296, 512
        %s298 = scalar_lea.vmem [#allocation6], %s297
        // Predicated region
        $region45: #{tpu_custom_call.1} parent=39 // pred_check
          %p299 = pneg %p83
        $region46: #{tpu_custom_call.1} parent=39 // pred_check_branch
          %301 = sbr.rel (%p299) target = $region48
        $region47: #{tpu_custom_call.1} parent=39 // pred_region
          %302 = dma.done %s295, 8192
        $region48: #{tpu_custom_call.1} parent=39 // pred_fallthru
          _
        %s303 = sand.u32 %s24, 1
        %s304 = scalar_lea.sflag [#allocation7], %s303
        %s305 = sand.u32 %s96, 1
        %s306 = smul.addr %s305, 4
        %s307 = scalar_lea.vmem [#allocation8], %s306
        // Predicated region
        $region49: #{tpu_custom_call.1} parent=39 // pred_check
          %p308 = pneg %p109
        $region50: #{tpu_custom_call.1} parent=39 // pred_check_branch
          %310 = sbr.rel (%p308) target = $region52
        $region51: #{tpu_custom_call.1} parent=39 // pred_region
          %311 = dma.done %s304, 64
        $region52: #{tpu_custom_call.1} parent=39 // pred_fallthru
          _
        %s312 = sand.u32 %s122, 1
        %s313 = scalar_lea.sflag [#allocation10], %s312
        %s314 = sand.u32 %s122, 1
        %s315 = smul.addr %s314, 256
        %s316 = scalar_lea.vmem [#allocation9], %s315
        // Predicated region
        $region53: #{tpu_custom_call.1} parent=39 // pred_check
          %p317 = pneg %p135
        $region54: #{tpu_custom_call.1} parent=39 // pred_check_branch
          %319 = sbr.rel (%p317) target = $region56
        $region55: #{tpu_custom_call.1} parent=39 // pred_region
          %320 = dma.done %s313, 4096
        $region56: #{tpu_custom_call.1} parent=39 // pred_fallthru
          _
        %p321 = pneg %p57
        %p322 = pneg %p54
        %s323 = sand.u32 %s24, 1
        %s324 = scalar_lea.sflag [#allocation7], %s323
        %s325 = sand.u32 %s70, 1
        %s326 = smul.addr %s325, 512
        %s327 = scalar_lea.vmem [#allocation6], %s326
        %p328 = pneg %p83
        %p329 = pneg %p80
        %s330 = sand.u32 %s24, 1
        %s331 = scalar_lea.sflag [#allocation7], %s330
        %s332 = sand.u32 %s96, 1
        %s333 = smul.addr %s332, 4
        %s334 = scalar_lea.vmem [#allocation8], %s333
        %p335 = pneg %p109
        %p336 = pneg %p106
        %s337 = sand.u32 %s122, 1
        %s338 = scalar_lea.sflag [#allocation10], %s337
        %s339 = sand.u32 %s122, 1
        %s340 = smul.addr %s339, 256
        %s341 = scalar_lea.vmem [#allocation9], %s340
        %p342 = pneg %p135
        %p343 = pneg %p132
        %p344 = pneg %p156
        %p345 = pneg %p153
        %p346 = pneg %p182
        %p347 = pneg %p179
        %s348 = smul.u32 2, %s28
        %s349 = smul.u32 4, %s29
        %s350 = smul.u32 4, %s29
        %s351 = smul.u32 32, %s29
        %s352 = smul.u32 2, %s28
        %p353 = scmp.eq.s32.totalorder %s29, 0
        // Predicated region
        $region57: #{tpu_custom_call.1} parent=39 // pred_check
          %p354 = pneg %p353
        $region58: #{tpu_custom_call.1} parent=39 // pred_check_branch
          %356 = sbr.rel (%p354) target = $region60
        $region59: #{tpu_custom_call.1} parent=39 // pred_region
          %357 = vst [vmem:[#allocation2] sm:$0xff] 0.0
          %358 = vst [vmem:[#allocation2 + $0x8] sm:$0xff] 0.0
          %359 = vst [vmem:[#allocation2 + $0x10] sm:$0xff] 0.0
          %360 = vst [vmem:[#allocation2 + $0x18] sm:$0xff] 0.0
        $region60: #{tpu_custom_call.1} parent=39 // pred_fallthru
          _
        %v361 = vld [vmem:[#allocation3] sm:$0xff]
        %v362 = vld [vmem:[#allocation3 + $0x8] sm:$0xff]
        %v363 = vld [vmem:[%s298] sm:$0xff]
        %v364 = vld [vmem:[%s298 + $0x8] sm:$0xff]
        %v365 = vld [vmem:[%s298 + $0x10] sm:$0xff]
        %v366 = vld [vmem:[%s298 + $0x18] sm:$0xff]
        %v367 = vld [vmem:[%s298 + $0x20] sm:$0xff]
        %v368 = vld [vmem:[%s298 + $0x28] sm:$0xff]
        %v369 = vld [vmem:[%s298 + $0x30] sm:$0xff]
        %v370 = vld [vmem:[%s298 + $0x38] sm:$0xff]
        %v371 = vld [vmem:[%s298 + $0x40] sm:$0xff]
        %v372 = vld [vmem:[%s298 + $0x48] sm:$0xff]
        %v373 = vld [vmem:[%s298 + $0x50] sm:$0xff]
        %v374 = vld [vmem:[%s298 + $0x58] sm:$0xff]
        %v375 = vld [vmem:[%s298 + $0x60] sm:$0xff]
        %v376 = vld [vmem:[%s298 + $0x68] sm:$0xff]
        %v377 = vld [vmem:[%s298 + $0x70] sm:$0xff]
        %v378 = vld [vmem:[%s298 + $0x78] sm:$0xff]
        %v379 = vld [vmem:[%s298 + $0x80] sm:$0xff]
        %v380 = vld [vmem:[%s298 + $0x88] sm:$0xff]
        %v381 = vld [vmem:[%s298 + $0x90] sm:$0xff]
        %v382 = vld [vmem:[%s298 + $0x98] sm:$0xff]
        %v383 = vld [vmem:[%s298 + $0xa0] sm:$0xff]
        %v384 = vld [vmem:[%s298 + $0xa8] sm:$0xff]
        %v385 = vld [vmem:[%s298 + $0xb0] sm:$0xff]
        %v386 = vld [vmem:[%s298 + $0xb8] sm:$0xff]
        %v387 = vld [vmem:[%s298 + $0xc0] sm:$0xff]
        %v388 = vld [vmem:[%s298 + $0xc8] sm:$0xff]
        %v389 = vld [vmem:[%s298 + $0xd0] sm:$0xff]
        %v390 = vld [vmem:[%s298 + $0xd8] sm:$0xff]
        %v391 = vld [vmem:[%s298 + $0xe0] sm:$0xff]
        %v392 = vld [vmem:[%s298 + $0xe8] sm:$0xff]
        %v393 = vld [vmem:[%s298 + $0xf0] sm:$0xff]
        %v394 = vld [vmem:[%s298 + $0xf8] sm:$0xff]
        %v395 = vld [vmem:[%s298 + $0x100] sm:$0xff]
        %v396 = vld [vmem:[%s298 + $0x108] sm:$0xff]
        %v397 = vld [vmem:[%s298 + $0x110] sm:$0xff]
        %v398 = vld [vmem:[%s298 + $0x118] sm:$0xff]
        %v399 = vld [vmem:[%s298 + $0x120] sm:$0xff]
        %v400 = vld [vmem:[%s298 + $0x128] sm:$0xff]
        %v401 = vld [vmem:[%s298 + $0x130] sm:$0xff]
        %v402 = vld [vmem:[%s298 + $0x138] sm:$0xff]
        %v403 = vld [vmem:[%s298 + $0x140] sm:$0xff]
        %v404 = vld [vmem:[%s298 + $0x148] sm:$0xff]
        %v405 = vld [vmem:[%s298 + $0x150] sm:$0xff]
        %v406 = vld [vmem:[%s298 + $0x158] sm:$0xff]
        %v407 = vld [vmem:[%s298 + $0x160] sm:$0xff]
        %v408 = vld [vmem:[%s298 + $0x168] sm:$0xff]
        %v409 = vld [vmem:[%s298 + $0x170] sm:$0xff]
        %v410 = vld [vmem:[%s298 + $0x178] sm:$0xff]
        %v411 = vld [vmem:[%s298 + $0x180] sm:$0xff]
        %v412 = vld [vmem:[%s298 + $0x188] sm:$0xff]
        %v413 = vld [vmem:[%s298 + $0x190] sm:$0xff]
        %v414 = vld [vmem:[%s298 + $0x198] sm:$0xff]
        %v415 = vld [vmem:[%s298 + $0x1a0] sm:$0xff]
        %v416 = vld [vmem:[%s298 + $0x1a8] sm:$0xff]
        %v417 = vld [vmem:[%s298 + $0x1b0] sm:$0xff]
        %v418 = vld [vmem:[%s298 + $0x1b8] sm:$0xff]
        %v419 = vld [vmem:[%s298 + $0x1c0] sm:$0xff]
        %v420 = vld [vmem:[%s298 + $0x1c8] sm:$0xff]
        %v421 = vld [vmem:[%s298 + $0x1d0] sm:$0xff]
        %v422 = vld [vmem:[%s298 + $0x1d8] sm:$0xff]
        %v423 = vld [vmem:[%s298 + $0x1e0] sm:$0xff]
        %v424 = vld [vmem:[%s298 + $0x1e8] sm:$0xff]
        %v425 = vld [vmem:[%s298 + $0x1f0] sm:$0xff]
        %v426 = vld [vmem:[%s298 + $0x1f8] sm:$0xff]
        %v427 = vld [vmem:[%s307] sm:$0xf]
        %v429 = vlaneseq
        %v430 = vshrl.u32 %v429, 7
        %v431 = vsub.s32 0, %v430
        %v432 = vrot.slane %v427, %v431
        %v433 = vlaneseq
        %v434 = vshrl.u32 %v433, 7
        %v435 = vsub.s32 1, %v434
        %v436 = vrot.slane %v427, %v435
        %v437 = vlaneseq
        %v438 = vshrl.u32 %v437, 7
        %v439 = vsub.s32 2, %v438
        %v440 = vrot.slane %v427, %v439
        %v441 = vlaneseq
        %v442 = vshrl.u32 %v441, 7
        %v443 = vsub.s32 3, %v442
        %v444 = vrot.slane %v427, %v443
        %v451 = vunpack.c.l.b16 %v361
        %v452 = vunpack.c.h.b16 %v361
        %v453 = vunpack.c.l.b16 %v362
        %v454 = vunpack.c.h.b16 %v362
        %v455 = vpack.c.b16 %v453, %v451
        %v456 = vpack.c.b16 %v454, %v452
        %v523 = vunpack.c.l.b16 %v363
        %v524 = vunpack.c.h.b16 %v363
        %v525 = vunpack.c.l.b16 %v364
        %v526 = vunpack.c.h.b16 %v364
        %v527 = vunpack.c.l.b16 %v365
        %v528 = vunpack.c.h.b16 %v365
        %v529 = vunpack.c.l.b16 %v366
        %v530 = vunpack.c.h.b16 %v366
        %v531 = vunpack.c.l.b16 %v367
        %v532 = vunpack.c.h.b16 %v367
        %v533 = vunpack.c.l.b16 %v368
        %v534 = vunpack.c.h.b16 %v368
        %v535 = vunpack.c.l.b16 %v369
        %v536 = vunpack.c.h.b16 %v369
        %v537 = vunpack.c.l.b16 %v370
        %v538 = vunpack.c.h.b16 %v370
        %v539 = vunpack.c.l.b16 %v371
        %v540 = vunpack.c.h.b16 %v371
        %v541 = vunpack.c.l.b16 %v372
        %v542 = vunpack.c.h.b16 %v372
        %v543 = vunpack.c.l.b16 %v373
        %v544 = vunpack.c.h.b16 %v373
        %v545 = vunpack.c.l.b16 %v374
        %v546 = vunpack.c.h.b16 %v374
        %v547 = vunpack.c.l.b16 %v375
        %v548 = vunpack.c.h.b16 %v375
        %v549 = vunpack.c.l.b16 %v376
        %v550 = vunpack.c.h.b16 %v376
        %v551 = vunpack.c.l.b16 %v377
        %v552 = vunpack.c.h.b16 %v377
        %v553 = vunpack.c.l.b16 %v378
        %v554 = vunpack.c.h.b16 %v378
        %v555 = vunpack.c.l.b16 %v379
        %v556 = vunpack.c.h.b16 %v379
        %v557 = vunpack.c.l.b16 %v380
        %v558 = vunpack.c.h.b16 %v380
        %v559 = vunpack.c.l.b16 %v381
        %v560 = vunpack.c.h.b16 %v381
        %v561 = vunpack.c.l.b16 %v382
        %v562 = vunpack.c.h.b16 %v382
        %v563 = vunpack.c.l.b16 %v383
        %v564 = vunpack.c.h.b16 %v383
        %v565 = vunpack.c.l.b16 %v384
        %v566 = vunpack.c.h.b16 %v384
        %v567 = vunpack.c.l.b16 %v385
        %v568 = vunpack.c.h.b16 %v385
        %v569 = vunpack.c.l.b16 %v386
        %v570 = vunpack.c.h.b16 %v386
        %v571 = vunpack.c.l.b16 %v387
        %v572 = vunpack.c.h.b16 %v387
        %v573 = vunpack.c.l.b16 %v388
        %v574 = vunpack.c.h.b16 %v388
        %v575 = vunpack.c.l.b16 %v389
        %v576 = vunpack.c.h.b16 %v389
        %v577 = vunpack.c.l.b16 %v390
        %v578 = vunpack.c.h.b16 %v390
        %v579 = vunpack.c.l.b16 %v391
        %v580 = vunpack.c.h.b16 %v391
        %v581 = vunpack.c.l.b16 %v392
        %v582 = vunpack.c.h.b16 %v392
        %v583 = vunpack.c.l.b16 %v393
        %v584 = vunpack.c.h.b16 %v393
        %v585 = vunpack.c.l.b16 %v394
        %v586 = vunpack.c.h.b16 %v394
        %v587 = vunpack.c.l.b16 %v395
        %v588 = vunpack.c.h.b16 %v395
        %v589 = vunpack.c.l.b16 %v396
        %v590 = vunpack.c.h.b16 %v396
        %v591 = vunpack.c.l.b16 %v397
        %v592 = vunpack.c.h.b16 %v397
        %v593 = vunpack.c.l.b16 %v398
        %v594 = vunpack.c.h.b16 %v398
        %v595 = vunpack.c.l.b16 %v399
        %v596 = vunpack.c.h.b16 %v399
        %v597 = vunpack.c.l.b16 %v400
        %v598 = vunpack.c.h.b16 %v400
        %v599 = vunpack.c.l.b16 %v401
        %v600 = vunpack.c.h.b16 %v401
        %v601 = vunpack.c.l.b16 %v402
        %v602 = vunpack.c.h.b16 %v402
        %v603 = vunpack.c.l.b16 %v403
        %v604 = vunpack.c.h.b16 %v403
        %v605 = vunpack.c.l.b16 %v404
        %v606 = vunpack.c.h.b16 %v404
        %v607 = vunpack.c.l.b16 %v405
        %v608 = vunpack.c.h.b16 %v405
        %v609 = vunpack.c.l.b16 %v406
        %v610 = vunpack.c.h.b16 %v406
        %v611 = vunpack.c.l.b16 %v407
        %v612 = vunpack.c.h.b16 %v407
        %v613 = vunpack.c.l.b16 %v408
        %v614 = vunpack.c.h.b16 %v408
        %v615 = vunpack.c.l.b16 %v409
        %v616 = vunpack.c.h.b16 %v409
        %v617 = vunpack.c.l.b16 %v410
        %v618 = vunpack.c.h.b16 %v410
        %v619 = vunpack.c.l.b16 %v411
        %v620 = vunpack.c.h.b16 %v411
        %v621 = vunpack.c.l.b16 %v412
        %v622 = vunpack.c.h.b16 %v412
        %v623 = vunpack.c.l.b16 %v413
        %v624 = vunpack.c.h.b16 %v413
        %v625 = vunpack.c.l.b16 %v414
        %v626 = vunpack.c.h.b16 %v414
        %v627 = vunpack.c.l.b16 %v415
        %v628 = vunpack.c.h.b16 %v415
        %v629 = vunpack.c.l.b16 %v416
        %v630 = vunpack.c.h.b16 %v416
        %v631 = vunpack.c.l.b16 %v417
        %v632 = vunpack.c.h.b16 %v417
        %v633 = vunpack.c.l.b16 %v418
        %v634 = vunpack.c.h.b16 %v418
        %v635 = vunpack.c.l.b16 %v419
        %v636 = vunpack.c.h.b16 %v419
        %v637 = vunpack.c.l.b16 %v420
        %v638 = vunpack.c.h.b16 %v420
        %v639 = vunpack.c.l.b16 %v421
        %v640 = vunpack.c.h.b16 %v421
        %v641 = vunpack.c.l.b16 %v422
        %v642 = vunpack.c.h.b16 %v422
        %v643 = vunpack.c.l.b16 %v423
        %v644 = vunpack.c.h.b16 %v423
        %v645 = vunpack.c.l.b16 %v424
        %v646 = vunpack.c.h.b16 %v424
        %v647 = vunpack.c.l.b16 %v425
        %v648 = vunpack.c.h.b16 %v425
        %v649 = vunpack.c.l.b16 %v426
        %v650 = vunpack.c.h.b16 %v426
        %v651 = vpack.c.b16 %v527, %v523
        %v652 = vpack.c.b16 %v528, %v524
        %v653 = vpack.c.b16 %v529, %v525
        %v654 = vpack.c.b16 %v530, %v526
        %v655 = vpack.c.b16 %v535, %v531
        %v656 = vpack.c.b16 %v536, %v532
        %v657 = vpack.c.b16 %v537, %v533
        %v658 = vpack.c.b16 %v538, %v534
        %v659 = vpack.c.b16 %v543, %v539
        %v660 = vpack.c.b16 %v544, %v540
        %v661 = vpack.c.b16 %v545, %v541
        %v662 = vpack.c.b16 %v546, %v542
        %v663 = vpack.c.b16 %v551, %v547
        %v664 = vpack.c.b16 %v552, %v548
        %v665 = vpack.c.b16 %v553, %v549
        %v666 = vpack.c.b16 %v554, %v550
        %v667 = vpack.c.b16 %v559, %v555
        %v668 = vpack.c.b16 %v560, %v556
        %v669 = vpack.c.b16 %v561, %v557
        %v670 = vpack.c.b16 %v562, %v558
        %v671 = vpack.c.b16 %v567, %v563
        %v672 = vpack.c.b16 %v568, %v564
        %v673 = vpack.c.b16 %v569, %v565
        %v674 = vpack.c.b16 %v570, %v566
        %v675 = vpack.c.b16 %v575, %v571
        %v676 = vpack.c.b16 %v576, %v572
        %v677 = vpack.c.b16 %v577, %v573
        %v678 = vpack.c.b16 %v578, %v574
        %v679 = vpack.c.b16 %v583, %v579
        %v680 = vpack.c.b16 %v584, %v580
        %v681 = vpack.c.b16 %v585, %v581
        %v682 = vpack.c.b16 %v586, %v582
        %v683 = vpack.c.b16 %v591, %v587
        %v684 = vpack.c.b16 %v592, %v588
        %v685 = vpack.c.b16 %v593, %v589
        %v686 = vpack.c.b16 %v594, %v590
        %v687 = vpack.c.b16 %v599, %v595
        %v688 = vpack.c.b16 %v600, %v596
        %v689 = vpack.c.b16 %v601, %v597
        %v690 = vpack.c.b16 %v602, %v598
        %v691 = vpack.c.b16 %v607, %v603
        %v692 = vpack.c.b16 %v608, %v604
        %v693 = vpack.c.b16 %v609, %v605
        %v694 = vpack.c.b16 %v610, %v606
        %v695 = vpack.c.b16 %v615, %v611
        %v696 = vpack.c.b16 %v616, %v612
        %v697 = vpack.c.b16 %v617, %v613
        %v698 = vpack.c.b16 %v618, %v614
        %v699 = vpack.c.b16 %v623, %v619
        %v700 = vpack.c.b16 %v624, %v620
        %v701 = vpack.c.b16 %v625, %v621
        %v702 = vpack.c.b16 %v626, %v622
        %v703 = vpack.c.b16 %v631, %v627
        %v704 = vpack.c.b16 %v632, %v628
        %v705 = vpack.c.b16 %v633, %v629
        %v706 = vpack.c.b16 %v634, %v630
        %v707 = vpack.c.b16 %v639, %v635
        %v708 = vpack.c.b16 %v640, %v636
        %v709 = vpack.c.b16 %v641, %v637
        %v710 = vpack.c.b16 %v642, %v638
        %v711 = vpack.c.b16 %v647, %v643
        %v712 = vpack.c.b16 %v648, %v644
        %v713 = vpack.c.b16 %v649, %v645
        %v714 = vpack.c.b16 %v650, %v646
        %779 = vmatprep.subr.bf16.mxu0 %v680
        %780 = vmatpush1.bf16.msra.mxu0 %v679
        %781 = vmatprep.subr.bf16.mxu0 %v676
        %782 = vmatpush1.bf16.msra.mxu0 %v675
        %783 = vmatprep.subr.bf16.mxu0 %v672
        %784 = vmatpush1.bf16.msra.mxu0 %v671
        %785 = vmatprep.subr.bf16.mxu0 %v668
        %786 = vmatpush1.bf16.msra.mxu0 %v667
        %787 = vmatprep.subr.bf16.mxu0 %v664
        %788 = vmatpush1.bf16.msra.mxu0 %v663
        %789 = vmatprep.subr.bf16.mxu0 %v660
        %790 = vmatpush1.bf16.msra.mxu0 %v659
        %791 = vmatprep.subr.bf16.mxu0 %v656
        %792 = vmatpush1.bf16.msra.mxu0 %v655
        %793 = vmatprep.subr.bf16.mxu0 %v652
        %794 = vmatpush1.bf16.msra.mxu0 %v651
        %795 = vmatprep.subr.bf16.mxu0 %v712
        %796 = vmatpush2.bf16.msra.mxu0 %v711
        %797 = vmatprep.subr.bf16.mxu0 %v708
        %798 = vmatpush2.bf16.msra.mxu0 %v707
        %799 = vmatprep.subr.bf16.mxu0 %v704
        %800 = vmatpush2.bf16.msra.mxu0 %v703
        %801 = vmatprep.subr.bf16.mxu0 %v700
        %802 = vmatpush2.bf16.msra.mxu0 %v699
        %803 = vmatprep.subr.bf16.mxu0 %v696
        %804 = vmatpush2.bf16.msra.mxu0 %v695
        %805 = vmatprep.subr.bf16.mxu0 %v692
        %806 = vmatpush2.bf16.msra.mxu0 %v691
        %807 = vmatprep.subr.bf16.mxu0 %v688
        %808 = vmatpush2.bf16.msra.mxu0 %v687
        %809 = vmatprep.subr.bf16.mxu0 %v684
        %810 = vmatpush2.bf16.msra.mxu0 %v683
        %811 = vmatprep.mubr.bf16.mxu0 %v456
        %812 = vmatmul.mubr.bf16.gmra.mxu0 %v455
        %v813 = vpop.f32.mrf.mxu0
        %v814 = vadd.f32 %v432, %v813
        %v815 = vpop.f32.mrf.mxu0
        %v816 = vadd.f32 %v436, %v815
        %v817 = vpop.f32.mrf.mxu0
        %v818 = vadd.f32 %v432, %v817
        %v819 = vpop.f32.mrf.mxu0
        %v820 = vadd.f32 %v436, %v819
        %821 = vdwg.mxu0
        %822 = vmatprep.subr.bf16.mxu0 %v682
        %823 = vmatpush1.bf16.msra.mxu0 %v681
        %824 = vmatprep.subr.bf16.mxu0 %v678
        %825 = vmatpush1.bf16.msra.mxu0 %v677
        %826 = vmatprep.subr.bf16.mxu0 %v674
        %827 = vmatpush1.bf16.msra.mxu0 %v673
        %828 = vmatprep.subr.bf16.mxu0 %v670
        %829 = vmatpush1.bf16.msra.mxu0 %v669
        %830 = vmatprep.subr.bf16.mxu0 %v666
        %831 = vmatpush1.bf16.msra.mxu0 %v665
        %832 = vmatprep.subr.bf16.mxu0 %v662
        %833 = vmatpush1.bf16.msra.mxu0 %v661
        %834 = vmatprep.subr.bf16.mxu0 %v658
        %835 = vmatpush1.bf16.msra.mxu0 %v657
        %836 = vmatprep.subr.bf16.mxu0 %v654
        %837 = vmatpush1.bf16.msra.mxu0 %v653
        %838 = vmatprep.subr.bf16.mxu0 %v714
        %839 = vmatpush2.bf16.msra.mxu0 %v713
        %840 = vmatprep.subr.bf16.mxu0 %v710
        %841 = vmatpush2.bf16.msra.mxu0 %v709
        %842 = vmatprep.subr.bf16.mxu0 %v706
        %843 = vmatpush2.bf16.msra.mxu0 %v705
        %844 = vmatprep.subr.bf16.mxu0 %v702
        %845 = vmatpush2.bf16.msra.mxu0 %v701
        %846 = vmatprep.subr.bf16.mxu0 %v698
        %847 = vmatpush2.bf16.msra.mxu0 %v697
        %848 = vmatprep.subr.bf16.mxu0 %v694
        %849 = vmatpush2.bf16.msra.mxu0 %v693
        %850 = vmatprep.subr.bf16.mxu0 %v690
        %851 = vmatpush2.bf16.msra.mxu0 %v689
        %852 = vmatprep.subr.bf16.mxu0 %v686
        %853 = vmatpush2.bf16.msra.mxu0 %v685
        %854 = vmatprep.mubr.bf16.mxu0 %v456
        %855 = vmatmul.mubr.bf16.gmra.mxu0 %v455
        %v856 = vpop.f32.mrf.mxu0
        %v857 = vadd.f32 %v440, %v856
        %v858 = vpop.f32.mrf.mxu0
        %v859 = vadd.f32 %v444, %v858
        %v860 = vpop.f32.mrf.mxu0
        %v861 = vadd.f32 %v440, %v860
        %v862 = vpop.f32.mrf.mxu0
        %v863 = vadd.f32 %v444, %v862
        %864 = vdwg.mxu0
        %v865 = vxor.u32 %v814, 2147483648
        %v866 = vxor.u32 %v816, 2147483648
        %v867 = vxor.u32 %v818, 2147483648
        %v868 = vxor.u32 %v820, 2147483648
        %v869 = vmul.f32 %v865, 1.442695
        %v870 = vpow.pop %v869
        %v871 = vmul.f32 %v866, 1.442695
        %v872 = vpow.pop %v871
        %v873 = vmul.f32 %v867, 1.442695
        %v874 = vpow.pop %v873
        %v875 = vmul.f32 %v868, 1.442695
        %v876 = vpow.pop %v875
        %v877 = vadd.f32 %v870, 1.0
        %v878 = vadd.f32 %v872, 1.0
        %v879 = vadd.f32 %v874, 1.0
        %v880 = vadd.f32 %v876, 1.0
        %v881 = vrcp.pop %v877
        %v882 = vmul.f32 1.0, %v881
        %v883 = vrcp.pop %v878
        %v884 = vmul.f32 1.0, %v883
        %v885 = vrcp.pop %v879
        %v886 = vmul.f32 1.0, %v885
        %v887 = vrcp.pop %v880
        %v888 = vmul.f32 1.0, %v887
        %v889 = vmul.f32 %v814, %v882
        %v890 = vmul.f32 %v816, %v884
        %v891 = vmul.f32 %v818, %v886
        %v892 = vmul.f32 %v820, %v888
        %v893 = vmul.f32 %v889, %v857
        %v894 = vmul.f32 %v890, %v859
        %v895 = vmul.f32 %v891, %v861
        %v896 = vmul.f32 %v892, %v863
        %v897 = vld [vmem:[#allocation2] sm:$0xff]
        %v898 = vld [vmem:[#allocation2 + $0x8] sm:$0xff]
        %v899 = vld [vmem:[#allocation2 + $0x10] sm:$0xff]
        %v900 = vld [vmem:[#allocation2 + $0x18] sm:$0xff]
        %v901 = vpack.c.bf16 %v895, %v893
        %v902 = vpack.c.bf16 %v896, %v894
        %v903 = vld [vmem:[%s316] sm:$0xff]
        %v904 = vld [vmem:[%s316 + $0x8] sm:$0xff]
        %v905 = vld [vmem:[%s316 + $0x10] sm:$0xff]
        %v906 = vld [vmem:[%s316 + $0x18] sm:$0xff]
        %v907 = vld [vmem:[%s316 + $0x20] sm:$0xff]
        %v908 = vld [vmem:[%s316 + $0x28] sm:$0xff]
        %v909 = vld [vmem:[%s316 + $0x30] sm:$0xff]
        %v910 = vld [vmem:[%s316 + $0x38] sm:$0xff]
        %v911 = vld [vmem:[%s316 + $0x40] sm:$0xff]
        %v912 = vld [vmem:[%s316 + $0x48] sm:$0xff]
        %v913 = vld [vmem:[%s316 + $0x50] sm:$0xff]
        %v914 = vld [vmem:[%s316 + $0x58] sm:$0xff]
        %v915 = vld [vmem:[%s316 + $0x60] sm:$0xff]
        %v916 = vld [vmem:[%s316 + $0x68] sm:$0xff]
        %v917 = vld [vmem:[%s316 + $0x70] sm:$0xff]
        %v918 = vld [vmem:[%s316 + $0x78] sm:$0xff]
        %v919 = vld [vmem:[%s316 + $0x80] sm:$0xff]
        %v920 = vld [vmem:[%s316 + $0x88] sm:$0xff]
        %v921 = vld [vmem:[%s316 + $0x90] sm:$0xff]
        %v922 = vld [vmem:[%s316 + $0x98] sm:$0xff]
        %v923 = vld [vmem:[%s316 + $0xa0] sm:$0xff]
        %v924 = vld [vmem:[%s316 + $0xa8] sm:$0xff]
        %v925 = vld [vmem:[%s316 + $0xb0] sm:$0xff]
        %v926 = vld [vmem:[%s316 + $0xb8] sm:$0xff]
        %v927 = vld [vmem:[%s316 + $0xc0] sm:$0xff]
        %v928 = vld [vmem:[%s316 + $0xc8] sm:$0xff]
        %v929 = vld [vmem:[%s316 + $0xd0] sm:$0xff]
        %v930 = vld [vmem:[%s316 + $0xd8] sm:$0xff]
        %v931 = vld [vmem:[%s316 + $0xe0] sm:$0xff]
        %v932 = vld [vmem:[%s316 + $0xe8] sm:$0xff]
        %v933 = vld [vmem:[%s316 + $0xf0] sm:$0xff]
        %v934 = vld [vmem:[%s316 + $0xf8] sm:$0xff]
        %v967 = vunpack.c.l.b16 %v903
        %v968 = vunpack.c.h.b16 %v903
        %v969 = vunpack.c.l.b16 %v904
        %v970 = vunpack.c.h.b16 %v904
        %v971 = vunpack.c.l.b16 %v905
        %v972 = vunpack.c.h.b16 %v905
        %v973 = vunpack.c.l.b16 %v906
        %v974 = vunpack.c.h.b16 %v906
        %v975 = vunpack.c.l.b16 %v907
        %v976 = vunpack.c.h.b16 %v907
        %v977 = vunpack.c.l.b16 %v908
        %v978 = vunpack.c.h.b16 %v908
        %v979 = vunpack.c.l.b16 %v909
        %v980 = vunpack.c.h.b16 %v909
        %v981 = vunpack.c.l.b16 %v910
        %v982 = vunpack.c.h.b16 %v910
        %v983 = vunpack.c.l.b16 %v911
        %v984 = vunpack.c.h.b16 %v911
        %v985 = vunpack.c.l.b16 %v912
        %v986 = vunpack.c.h.b16 %v912
        %v987 = vunpack.c.l.b16 %v913
        %v988 = vunpack.c.h.b16 %v913
        %v989 = vunpack.c.l.b16 %v914
        %v990 = vunpack.c.h.b16 %v914
        %v991 = vunpack.c.l.b16 %v915
        %v992 = vunpack.c.h.b16 %v915
        %v993 = vunpack.c.l.b16 %v916
        %v994 = vunpack.c.h.b16 %v916
        %v995 = vunpack.c.l.b16 %v917
        %v996 = vunpack.c.h.b16 %v917
        %v997 = vunpack.c.l.b16 %v918
        %v998 = vunpack.c.h.b16 %v918
        %v999 = vunpack.c.l.b16 %v919
        %v1000 = vunpack.c.h.b16 %v919
        %v1001 = vunpack.c.l.b16 %v920
        %v1002 = vunpack.c.h.b16 %v920
        %v1003 = vunpack.c.l.b16 %v921
        %v1004 = vunpack.c.h.b16 %v921
        %v1005 = vunpack.c.l.b16 %v922
        %v1006 = vunpack.c.h.b16 %v922
        %v1007 = vunpack.c.l.b16 %v923
        %v1008 = vunpack.c.h.b16 %v923
        %v1009 = vunpack.c.l.b16 %v924
        %v1010 = vunpack.c.h.b16 %v924
        %v1011 = vunpack.c.l.b16 %v925
        %v1012 = vunpack.c.h.b16 %v925
        %v1013 = vunpack.c.l.b16 %v926
        %v1014 = vunpack.c.h.b16 %v926
        %v1015 = vunpack.c.l.b16 %v927
        %v1016 = vunpack.c.h.b16 %v927
        %v1017 = vunpack.c.l.b16 %v928
        %v1018 = vunpack.c.h.b16 %v928
        %v1019 = vunpack.c.l.b16 %v929
        %v1020 = vunpack.c.h.b16 %v929
        %v1021 = vunpack.c.l.b16 %v930
        %v1022 = vunpack.c.h.b16 %v930
        %v1023 = vunpack.c.l.b16 %v931
        %v1024 = vunpack.c.h.b16 %v931
        %v1025 = vunpack.c.l.b16 %v932
        %v1026 = vunpack.c.h.b16 %v932
        %v1027 = vunpack.c.l.b16 %v933
        %v1028 = vunpack.c.h.b16 %v933
        %v1029 = vunpack.c.l.b16 %v934
        %v1030 = vunpack.c.h.b16 %v934
        %v1031 = vpack.c.b16 %v969, %v967
        %v1032 = vpack.c.b16 %v970, %v968
        %v1033 = vpack.c.b16 %v973, %v971
        %v1034 = vpack.c.b16 %v974, %v972
        %v1035 = vpack.c.b16 %v977, %v975
        %v1036 = vpack.c.b16 %v978, %v976
        %v1037 = vpack.c.b16 %v981, %v979
        %v1038 = vpack.c.b16 %v982, %v980
        %v1039 = vpack.c.b16 %v985, %v983
        %v1040 = vpack.c.b16 %v986, %v984
        %v1041 = vpack.c.b16 %v989, %v987
        %v1042 = vpack.c.b16 %v990, %v988
        %v1043 = vpack.c.b16 %v993, %v991
        %v1044 = vpack.c.b16 %v994, %v992
        %v1045 = vpack.c.b16 %v997, %v995
        %v1046 = vpack.c.b16 %v998, %v996
        %v1047 = vpack.c.b16 %v1001, %v999
        %v1048 = vpack.c.b16 %v1002, %v1000
        %v1049 = vpack.c.b16 %v1005, %v1003
        %v1050 = vpack.c.b16 %v1006, %v1004
        %v1051 = vpack.c.b16 %v1009, %v1007
        %v1052 = vpack.c.b16 %v1010, %v1008
        %v1053 = vpack.c.b16 %v1013, %v1011
        %v1054 = vpack.c.b16 %v1014, %v1012
        %v1055 = vpack.c.b16 %v1017, %v1015
        %v1056 = vpack.c.b16 %v1018, %v1016
        %v1057 = vpack.c.b16 %v1021, %v1019
        %v1058 = vpack.c.b16 %v1022, %v1020
        %v1059 = vpack.c.b16 %v1025, %v1023
        %v1060 = vpack.c.b16 %v1026, %v1024
        %v1061 = vpack.c.b16 %v1029, %v1027
        %v1062 = vpack.c.b16 %v1030, %v1028
        %1095 = vmatprep.subr.bf16.mxu0 %v1046
        %1096 = vmatpush1.bf16.msra.mxu0 %v1045
        %1097 = vmatprep.subr.bf16.mxu0 %v1044
        %1098 = vmatpush1.bf16.msra.mxu0 %v1043
        %1099 = vmatprep.subr.bf16.mxu0 %v1042
        %1100 = vmatpush1.bf16.msra.mxu0 %v1041
        %1101 = vmatprep.subr.bf16.mxu0 %v1040
        %1102 = vmatpush1.bf16.msra.mxu0 %v1039
        %1103 = vmatprep.subr.bf16.mxu0 %v1038
        %1104 = vmatpush1.bf16.msra.mxu0 %v1037
        %1105 = vmatprep.subr.bf16.mxu0 %v1036
        %1106 = vmatpush1.bf16.msra.mxu0 %v1035
        %1107 = vmatprep.subr.bf16.mxu0 %v1034
        %1108 = vmatpush1.bf16.msra.mxu0 %v1033
        %1109 = vmatprep.subr.bf16.mxu0 %v1032
        %1110 = vmatpush1.bf16.msra.mxu0 %v1031
        %1111 = vmatprep.subr.bf16.mxu0 %v1062
        %1112 = vmatpush2.bf16.msra.mxu0 %v1061
        %1113 = vmatprep.subr.bf16.mxu0 %v1060
        %1114 = vmatpush2.bf16.msra.mxu0 %v1059
        %1115 = vmatprep.subr.bf16.mxu0 %v1058
        %1116 = vmatpush2.bf16.msra.mxu0 %v1057
        %1117 = vmatprep.subr.bf16.mxu0 %v1056
        %1118 = vmatpush2.bf16.msra.mxu0 %v1055
        %1119 = vmatprep.subr.bf16.mxu0 %v1054
        %1120 = vmatpush2.bf16.msra.mxu0 %v1053
        %1121 = vmatprep.subr.bf16.mxu0 %v1052
        %1122 = vmatpush2.bf16.msra.mxu0 %v1051
        %1123 = vmatprep.subr.bf16.mxu0 %v1050
        %1124 = vmatpush2.bf16.msra.mxu0 %v1049
        %1125 = vmatprep.subr.bf16.mxu0 %v1048
        %1126 = vmatpush2.bf16.msra.mxu0 %v1047
        %1127 = vmatprep.mubr.bf16.mxu0 %v902
        %1128 = vmatmul.mubr.bf16.gmra.mxu0 %v901
        %v1129 = vpop.f32.mrf.mxu0
        %v1130 = vadd.f32 0.0, %v1129
        %v1131 = vpop.f32.mrf.mxu0
        %v1132 = vadd.f32 0.0, %v1131
        %v1133 = vpop.f32.mrf.mxu0
        %v1134 = vadd.f32 0.0, %v1133
        %v1135 = vpop.f32.mrf.mxu0
        %v1136 = vadd.f32 0.0, %v1135
        %1137 = vdwg.mxu0
        %v1138 = vadd.f32 %v897, %v1130
        %v1139 = vadd.f32 %v898, %v1132
        %v1140 = vadd.f32 %v899, %v1134
        %v1141 = vadd.f32 %v900, %v1136
        %1142 = vst [vmem:[#allocation2] sm:$0xff] %v1138
        %1143 = vst [vmem:[#allocation2 + $0x8] sm:$0xff] %v1139
        %1144 = vst [vmem:[#allocation2 + $0x10] sm:$0xff] %v1140
        %1145 = vst [vmem:[#allocation2 + $0x18] sm:$0xff] %v1141
        %p1146 = scmp.eq.s32.totalorder %s29, 2
        // Predicated region
        $region61: #{tpu_custom_call.1} parent=39 // pred_check
          %p1147 = pneg %p1146
        $region62: #{tpu_custom_call.1} parent=39 // pred_check_branch
          %1149 = sbr.rel (%p1147) target = $region64
        $region63: #{tpu_custom_call.1} parent=39 // pred_region
          %v1150 = vld [vmem:[#allocation2] sm:$0xff]
          %v1151 = vld [vmem:[#allocation2 + $0x8] sm:$0xff]
          %v1152 = vld [vmem:[#allocation2 + $0x10] sm:$0xff]
          %v1153 = vld [vmem:[#allocation2 + $0x18] sm:$0xff]
          %v1154 = vld [vmem:[%s4] sm:$0x3]
          %v1156 = vlaneseq
          %v1157 = vshrl.u32 %v1156, 7
          %v1158 = vsub.s32 0, %v1157
          %v1159 = vrot.slane %v1154, %v1158
          %v1160 = vlaneseq
          %v1161 = vshrl.u32 %v1160, 7
          %v1162 = vsub.s32 1, %v1161
          %v1163 = vrot.slane %v1154, %v1162
          %v1166 = vadd.f32 %v1150, %v1159
          %v1167 = vadd.f32 %v1151, %v1163
          %v1168 = vadd.f32 %v1152, %v1159
          %v1169 = vadd.f32 %v1153, %v1163
          %1170 = vst [vmem:[#allocation11] sm:$0xff] %v1166
          %1171 = vst [vmem:[#allocation11 + $0x8] sm:$0xff] %v1167
          %1172 = vst [vmem:[#allocation11 + $0x10] sm:$0xff] %v1168
          %1173 = vst [vmem:[#allocation11 + $0x18] sm:$0xff] %v1169
        $region64: #{tpu_custom_call.1} parent=39 // pred_fallthru
          _
        // Predicated region
        $region65: #{tpu_custom_call.1} parent=39 // pred_check
          %p1174 = pneg %p179
        $region66: #{tpu_custom_call.1} parent=39 // pred_check_branch
          %1176 = sbr.rel (%p1174) target = $region68
        $region67: #{tpu_custom_call.1} parent=39 // pred_region
          %s1177 = smul.u32 2, %s28
          %s1179 = ssub.s32 512, 512
          %1180 = vsyncadd [#allocation5], %s1179
          %s1181 = smul.addr %s1177, 2
          %s1182 = smul.addr %s1181, 128
          %s1183 = scalar_lea.hbm %s5, %s1182
          %s1184 = sshll.u32 [#allocation11], 4
          %s1185 = int_to_ptr.vmem [resolvable:$true] %s1184
          %1190 = dma.vmem_to_hbm [thread:$0]  %s1185, 512, %s1183, [#allocation5], 256, 256, 16
        $region68: #{tpu_custom_call.1} parent=39 // pred_fallthru
          _
        // Predicated region
        $region69: #{tpu_custom_call.1} parent=39 // pred_check
          %p1191 = pneg %p179
        $region70: #{tpu_custom_call.1} parent=39 // pred_check_branch
          %1193 = sbr.rel (%p1191) target = $region72
        $region71: #{tpu_custom_call.1} parent=39 // pred_region
          %1194 = dma.done [#allocation5], 512
        $region72: #{tpu_custom_call.1} parent=39 // pred_fallthru
          _
      $region40: #{tpu_custom_call.1} parent=5 // pred_fallthru
        _
      %p1195 = scmp.le.s32.totalorder 2, %s19
      // Predicated region
      $region73: #{tpu_custom_call.1} parent=5 // pred_check
        %p1196 = pneg %p1195
      $region74: #{tpu_custom_call.1} parent=5 // pred_check_branch
        %1198 = sbr.rel (%p1196) target = $region76
      $region75: #{tpu_custom_call.1} parent=5 // pred_region
        %s1199 = ssub.s32 %s19, 2
      $region76: #{tpu_custom_call.1} parent=5 // pred_fallthru
        _
    $region6: #{tpu_custom_call.1} parent=1 // loop_footer
      %s23 = sadd.s32 1, %s19
    $region7: #{tpu_custom_call.1} parent=1 // loop_footer_branch
      %18 = sbr.rel target = $region3
    $region8: #{tpu_custom_call.1} parent=1 // loop_exit
      _
    %1200 = vsyncpa [#allocation4], 1
    %s1201 = scalar_lea.sflag [#allocation4], 1
    %1202 = vsyncpa %s1201, 1
    %1203 = vsyncpa [#allocation7], 1
    %s1204 = scalar_lea.sflag [#allocation7], 1
    %1205 = vsyncpa %s1204, 1
    %1206 = vsyncpa [#allocation10], 1
    %s1207 = scalar_lea.sflag [#allocation10], 1
    %1208 = vsyncpa %s1207, 1
    %1209 = vsyncpa [#allocation5], 1
    %s1210 = scalar_lea.sflag [#allocation5], 1
    %1211 = vsyncpa %s1210, 1

</llo_original>
